<compile_context>
chip_gen: v7x
topology: tpu7x:2x2x1
jax: 0.10.0
libtpu: 0.0.40
codegen_flags: <defaults>
</compile_context>

<pallas_src>
import functools

import jax
import jax.numpy as jnp
from jax import lax
from jax.experimental import pallas as pl
from jax.experimental.pallas import tpu as pltpu


def _self_attn_kernel(x_ref, m_ref, wv_ref, bias_ref, o_ref):
    # x_ref:    (B*S, V)  all batches flattened along rows
    # m_ref:    (V, V)    M = Wq^T @ Wk / sqrt(key_size)   (score fold)
    # wv_ref:   (V, V)    Wv^T (pre-transposed)
    # bias_ref: (B*S, B*S) additive block-diagonal mask (0 in-block, -1e30 off)
    x = x_ref[...]

    # Scores for every batch at once: s = (x @ M) @ x^T  -> (B*S, B*S).
    xm = jnp.dot(x, m_ref[...], preferred_element_type=jnp.float32)
    s = lax.dot_general(xm, x, (((1,), (1,)), ((), ())),
                        preferred_element_type=jnp.float32)

    # Block-diagonal bias keeps rows attending only within their own batch;
    # finite -1e30 + row-max subtraction -> exp underflows to exactly 0, no NaN.
    s = s + bias_ref[...]
    s = s - jnp.max(s, axis=-1, keepdims=True)
    p = jnp.exp(s)
    p = p * pl.reciprocal(jnp.sum(p, axis=-1, keepdims=True), approx=False)

    # Value projection and PV matmul; single full-block lane-aligned store.
    v = jnp.dot(x, wv_ref[...], preferred_element_type=jnp.float32)
    o_ref[...] = jnp.dot(p, v,
                         preferred_element_type=jnp.float32).astype(o_ref.dtype)


def prepare_self_attn(wq, wk, wv, key_size, batch, seq):
    """One-time weight/constant prep (hoisted out of the forward path).

    wq, wk: (K, V); wv: (V, V) in PyTorch nn.Linear (out_features, in_features)
    layout. Returns (M, Wv^T, additive block-diagonal bias).
    """
    inv_sqrt_key = 1.0 / (float(key_size) ** 0.5)
    # Fold the whole q/k path: q @ k^T / sqrt(K) == x @ (Wq^T Wk / sqrt(K)) @ x^T.
    m = jnp.dot(wq.T, wk, precision=lax.Precision.HIGHEST) * inv_sqrt_key  # (V, V)
    wv_t = wv.T                                                            # (V, V)

    n = batch * seq
    blk = jnp.arange(n, dtype=jnp.int32) // seq
    bias = jnp.where(blk[:, None] == blk[None, :], 0.0, -1e30).astype(jnp.float32)
    return m, wv_t, bias


@functools.partial(jax.jit, static_argnums=())
def self_attn(x, m, wv_t, bias):
    """x: (B, S, V) f32. m/wv_t/bias come from prepare_self_attn."""
    B, S, V = x.shape
    x_flat = x.reshape(B * S, V)

    out_flat = pl.pallas_call(
        _self_attn_kernel,
        out_shape=jax.ShapeDtypeStruct((B * S, V), jnp.float32),
        in_specs=[
            pl.BlockSpec(memory_space=pltpu.MemorySpace.VMEM),  # x_flat
            pl.BlockSpec(memory_space=pltpu.MemorySpace.VMEM),  # M
            pl.BlockSpec(memory_space=pltpu.MemorySpace.VMEM),  # Wv^T
            pl.BlockSpec(memory_space=pltpu.MemorySpace.VMEM),  # bias
        ],
        out_specs=pl.BlockSpec(memory_space=pltpu.MemorySpace.VMEM),
    )(x_flat, m, wv_t, bias)

    return out_flat.reshape(B, S, V)


def self_attn_ref(x, wq, wk, wv, key_size):
    """Pure-JAX reference mirroring the PyTorch module."""
    q = jnp.einsum("bsv,kv->bsk", x, wq)
    k = jnp.einsum("bsv,kv->bsk", x, wk)
    v = jnp.einsum("bsv,wv->bsw", x, wv)
    s = jnp.einsum("bsk,btk->bst", q, k) / (float(key_size) ** 0.5)
    p = jax.nn.softmax(s, axis=-1)
    return jnp.einsum("bst,btv->bsv", p, v)


if __name__ == "__main__":
    # Small shapes consistent with the module: batch=2, seq=8, value_size=32, key_size=16
    B, S, V, K = 2, 8, 32, 16

    key = jax.random.PRNGKey(0)
    kx, kq, kk, kv = jax.random.split(key, 4)

    x = jax.random.normal(kx, (B, S, V), dtype=jnp.float32)
    # PyTorch nn.Linear weight layout: (out_features, in_features)
    wq = jax.random.normal(kq, (K, V), dtype=jnp.float32) * 0.1
    wk = jax.random.normal(kk, (K, V), dtype=jnp.float32) * 0.1
    wv = jax.random.normal(kv, (V, V), dtype=jnp.float32) * 0.1

    # One-time prep (hoisted out of the per-call forward path).
    m, wv_t, bias = prepare_self_attn(wq, wk, wv, key_size=K, batch=B, seq=S)
    m, wv_t, bias = jax.block_until_ready((m, wv_t, bias))

    out = self_attn(x, m, wv_t, bias)
    out = jax.block_until_ready(out)

    ref = self_attn_ref(x, wq, wk, wv, key_size=K)
    assert out.shape == (B, S, V)
    assert jnp.allclose(out, ref, atol=1e-5, rtol=1e-5), "mismatch vs reference"

    print("KERNEL_OK")
</pallas_src>

<mosaic_0001>
module attributes {stable_mosaic.version = 11 : i64} {
  func.func @_self_attn_kernel(%arg0: memref<16x32xf32, #tpu.memory_space<vmem>>, %arg1: memref<32x32xf32, #tpu.memory_space<vmem>>, %arg2: memref<32x32xf32, #tpu.memory_space<vmem>>, %arg3: memref<16x16xf32, #tpu.memory_space<vmem>>, %arg4: memref<16x32xf32, #tpu.memory_space<vmem>>) attributes {dimension_semantics = [], scalar_prefetch = 0 : i64, scratch_operands = 0 : i64, tpu.core_type = #tpu.core_type<tc>} {
    %c0 = arith.constant 0 : index
    %c0_0 = arith.constant 0 : index
    %0 = vector.load %arg0[%c0, %c0_0] : memref<16x32xf32, #tpu.memory_space<vmem>>, vector<16x32xf32>
    %c0_1 = arith.constant 0 : index
    %c0_2 = arith.constant 0 : index
    %1 = vector.load %arg1[%c0_1, %c0_2] : memref<32x32xf32, #tpu.memory_space<vmem>>, vector<32x32xf32>
    %cst = arith.constant dense<0.000000e+00> : vector<16x32xf32>
    %2 = tpu.matmul %0, %1, %cst {dimension_numbers = #tpu.dot_dimension_numbers<[1], [0], [0], [1], [0, 0, 1, 1], [], []>} : vector<16x32xf32>, vector<32x32xf32>, vector<16x32xf32> -> vector<16x32xf32>
    %cst_3 = arith.constant dense<0.000000e+00> : vector<16x16xf32>
    %3 = tpu.matmul %2, %0, %cst_3 {dimension_numbers = #tpu.dot_dimension_numbers<[1], [1], [0], [0], [0, 0, 1, 0], [], []>} : vector<16x32xf32>, vector<16x32xf32>, vector<16x16xf32> -> vector<16x16xf32>
    %c0_4 = arith.constant 0 : index
    %c0_5 = arith.constant 0 : index
    %4 = vector.load %arg3[%c0_4, %c0_5] : memref<16x16xf32, #tpu.memory_space<vmem>>, vector<16x16xf32>
    %5 = arith.addf %3, %4 : vector<16x16xf32>
    %cst_6 = arith.constant dense<0xFF800000> : vector<16xf32>
    %6 = vector.multi_reduction <maximumf>, %5, %cst_6 [1] : vector<16x16xf32> to vector<16xf32>
    %7 = vector.shape_cast %6 : vector<16xf32> to vector<16x1xf32>
    %8 = vector.broadcast %7 : vector<16x1xf32> to vector<16x16xf32>
    %9 = arith.subf %5, %8 : vector<16x16xf32>
    %10 = math.exp %9 : vector<16x16xf32>
    %cst_7 = arith.constant dense<0.000000e+00> : vector<16xf32>
    %11 = vector.multi_reduction <add>, %10, %cst_7 [1] : vector<16x16xf32> to vector<16xf32>
    %12 = vector.shape_cast %11 : vector<16xf32> to vector<16x1xf32>
    %13 = tpu.reciprocal %12 : vector<16x1xf32> -> vector<16x1xf32>
    %14 = vector.broadcast %13 : vector<16x1xf32> to vector<16x16xf32>
    %15 = arith.mulf %10, %14 : vector<16x16xf32>
    %c0_8 = arith.constant 0 : index
    %c0_9 = arith.constant 0 : index
    %16 = vector.load %arg2[%c0_8, %c0_9] : memref<32x32xf32, #tpu.memory_space<vmem>>, vector<32x32xf32>
    %cst_10 = arith.constant dense<0.000000e+00> : vector<16x32xf32>
    %17 = tpu.matmul %0, %16, %cst_10 {dimension_numbers = #tpu.dot_dimension_numbers<[1], [0], [0], [1], [0, 0, 1, 1], [], []>} : vector<16x32xf32>, vector<32x32xf32>, vector<16x32xf32> -> vector<16x32xf32>
    %cst_11 = arith.constant dense<0.000000e+00> : vector<16x32xf32>
    %18 = tpu.matmul %15, %17, %cst_11 {dimension_numbers = #tpu.dot_dimension_numbers<[1], [0], [0], [1], [0, 0, 1, 1], [], []>} : vector<16x16xf32>, vector<16x32xf32>, vector<16x32xf32> -> vector<16x32xf32>
    %c0_12 = arith.constant 0 : index
    %c0_13 = arith.constant 0 : index
    %19 = vector.load %arg4[%c0_12, %c0_13] : memref<16x32xf32, #tpu.memory_space<vmem>>, vector<16x32xf32>
    tpu.vector_store %arg4[%c0_12, %c0_13], %18 {strides = array<i32>} : memref<16x32xf32, #tpu.memory_space<vmem>>, vector<16x32xf32>,
    return
  }
}

</mosaic_0001>

<llo_original>
// kernel: self_attn.1
$region0: #{self_attn.1}
  #allocation0 [shape = 'u32[]', space=smem, size = 0x4, offset = 0x4, fixed_abs, tag = 'smem constant byte address 0x4 - core index']
  #allocation1 [shape = 'u32[144,128]{1,0:T(1,128)}', space=vmem, size = 0x12000, scoped, tag = 'internal scratch']
  %s0 = inlined_call_operand.hbm [shape: f32[16,32], index: 0, kind: input, shape index: {}]
  %s1 = inlined_call_operand.hbm [shape: f32[32,32], index: 1, kind: input, shape index: {}]
  %s2 = inlined_call_operand.hbm [shape: f32[32,32], index: 2, kind: input, shape index: {}]
  %s3 = inlined_call_operand.hbm [shape: f32[16,16], index: 3, kind: input, shape index: {}]
  %s4 = inlined_call_operand.hbm [shape: f32[16,32], index: 4, kind: output, shape index: {}]
  %s5 = sld [smem:[#allocation0]]
  $region42: #{self_attn.1} parent=0
    _
  %s7 = ssub.s32 1, %s5
  %s8 = scalar_select 0, %s7, %s5
  $region1: #{self_attn.1} parent=0
    #allocation2 [shape = 'u8[8192]{0}', space=vmem, size = 0x2000, scoped, tag = 'input window, operand 0, single buffered']
    #allocation3 [shape = 's32[1]{0}', space=sflag, size = 0x4, scoped, tag = 'scoped memory for self_attn.1']
    #allocation4 [shape = 's32[1]{0}', space=sflag, size = 0x4, scoped, tag = 'scoped memory for self_attn.1']
    #allocation5 [shape = 'u8[16384]{0}', space=vmem, size = 0x4000, scoped, tag = 'input window, operand 1, single buffered']
    #allocation6 [shape = 's32[1]{0}', space=sflag, size = 0x4, scoped, tag = 'scoped memory for self_attn.1']
    #allocation7 [shape = 'u8[16384]{0}', space=vmem, size = 0x4000, scoped, tag = 'input window, operand 2, single buffered']
    #allocation8 [shape = 'u8[8192]{0}', space=vmem, size = 0x2000, scoped, tag = 'input window, operand 3, single buffered']
    #allocation9 [shape = 's32[1]{0}', space=sflag, size = 0x4, scoped, tag = 'scoped memory for self_attn.1']
    #allocation10 [shape = 'u8[8192]{0}', space=vmem, size = 0x2000, scoped, tag = 'output window, operand 0, single buffered']
    %9 = vsyncpa [#allocation3], 0
    %10 = vsyncpa [#allocation6], 0
    %11 = vsyncpa [#allocation9], 0
    %12 = vsyncpa [#allocation4], 0
    // Predicated region
    $region2: #{self_attn.1} parent=1 // pred_check
      _
    $region3: #{self_attn.1} parent=1 // pred_check_branch
      %14 = sbr.rel (0) target = $region5
    $region4: #{self_attn.1} parent=1 // pred_region
      %s16 = ssub.s32 256, 256
      %17 = vsyncadd [#allocation3], %s16
      %s18 = sshll.u32 [#allocation2], 4
      %s19 = int_to_ptr.vmem [resolvable:$true] %s18
      %24 = dma.hbm_to_vmem [thread:$0]  %s0, 256, %s19, [#allocation3], 128, 128, 8
    $region5: #{self_attn.1} parent=1 // pred_fallthru
      _
    // Predicated region
    $region6: #{self_attn.1} parent=1 // pred_check
      _
    $region7: #{self_attn.1} parent=1 // pred_check_branch
      %26 = sbr.rel (0) target = $region9
    $region8: #{self_attn.1} parent=1 // pred_region
      %s28 = ssub.s32 512, 512
      %29 = vsyncadd [#allocation6], %s28
      %s30 = sshll.u32 [#allocation5], 4
      %s31 = int_to_ptr.vmem [resolvable:$true] %s30
      %36 = dma.hbm_to_vmem [thread:$0]  %s1, 512, %s31, [#allocation6], 128, 128, 8
    $region9: #{self_attn.1} parent=1 // pred_fallthru
      _
    // Predicated region
    $region10: #{self_attn.1} parent=1 // pred_check
      _
    $region11: #{self_attn.1} parent=1 // pred_check_branch
      %38 = sbr.rel (0) target = $region13
    $region12: #{self_attn.1} parent=1 // pred_region
      %s40 = ssub.s32 512, 512
      %41 = vsyncadd [#allocation6], %s40
      %s42 = sshll.u32 [#allocation7], 4
      %s43 = int_to_ptr.vmem [resolvable:$true] %s42
      %48 = dma.hbm_to_vmem [thread:$0]  %s2, 512, %s43, [#allocation6], 128, 128, 8
    $region13: #{self_attn.1} parent=1 // pred_fallthru
      _
    // Predicated region
    $region14: #{self_attn.1} parent=1 // pred_check
      _
    $region15: #{self_attn.1} parent=1 // pred_check_branch
      %50 = sbr.rel (0) target = $region17
    $region16: #{self_attn.1} parent=1 // pred_region
      %s52 = ssub.s32 256, 256
      %53 = vsyncadd [#allocation9], %s52
      %s54 = sshll.u32 [#allocation8], 4
      %s55 = int_to_ptr.vmem [resolvable:$true] %s54
      %60 = dma.hbm_to_vmem [thread:$0]  %s3, 256, %s55, [#allocation9], 128, 128, 8
    $region17: #{self_attn.1} parent=1 // pred_fallthru
      _
    // Predicated region
    $region18: #{self_attn.1} parent=1 // pred_check
      _
    $region19: #{self_attn.1} parent=1 // pred_check_branch
      %62 = sbr.rel (0) target = $region21
    $region20: #{self_attn.1} parent=1 // pred_region
      %63 = dma.done [#allocation3], 256
    $region21: #{self_attn.1} parent=1 // pred_fallthru
      _
    // Predicated region
    $region22: #{self_attn.1} parent=1 // pred_check
      _
    $region23: #{self_attn.1} parent=1 // pred_check_branch
      %65 = sbr.rel (0) target = $region25
    $region24: #{self_attn.1} parent=1 // pred_region
      %66 = dma.done [#allocation6], 512
    $region25: #{self_attn.1} parent=1 // pred_fallthru
      _
    // Predicated region
    $region26: #{self_attn.1} parent=1 // pred_check
      _
    $region27: #{self_attn.1} parent=1 // pred_check_branch
      %68 = sbr.rel (0) target = $region29
    $region28: #{self_attn.1} parent=1 // pred_region
      %69 = dma.done [#allocation6], 512
    $region29: #{self_attn.1} parent=1 // pred_fallthru
      _
    // Predicated region
    $region30: #{self_attn.1} parent=1 // pred_check
      _
    $region31: #{self_attn.1} parent=1 // pred_check_branch
      %71 = sbr.rel (0) target = $region33
    $region32: #{self_attn.1} parent=1 // pred_region
      %72 = dma.done [#allocation9], 256
    $region33: #{self_attn.1} parent=1 // pred_fallthru
      _
    %v73 = vld [vmem:[#allocation2] sm:$0xff]
    %v74 = vld [vmem:[#allocation2 + $0x8] sm:$0xff]
    %v75 = vld [vmem:[#allocation5] sm:$0xff]
    %v76 = vld [vmem:[#allocation5 + $0x8] sm:$0xff]
    %v77 = vld [vmem:[#allocation5 + $0x10] sm:$0xff]
    %v78 = vld [vmem:[#allocation5 + $0x18] sm:$0xff]
    %vm79 = vcmask 261120
    %v81 = vsel %vm79, %v73, 0
    %v84 = vsel %vm79, %v74, 0
    %86 = vmatprep.subr.mxu0 0.0
    %87 = vmatpush1.msra.mxu0 %v75
    %88 = vmatprep.subr.mxu0 0.0
    %89 = vmatpush1.msra.mxu0 %v76
    %90 = vmatprep.subr.mxu0 0.0
    %91 = vmatpush1.msra.mxu0 %v77
    %92 = vmatprep.subr.mxu0 0.0
    %93 = vmatpush1.msra.mxu0 %v78
    %94 = vmatprep.subr.mxu0 0.0
    %95 = vmatpush1.msra.mxu0 0.0
    %96 = vmatprep.subr.mxu0 0.0
    %97 = vmatpush1.msra.mxu0 0.0
    %98 = vmatprep.subr.mxu0 0.0
    %99 = vmatpush1.msra.mxu0 0.0
    %100 = vmatprep.subr.mxu0 0.0
    %101 = vmatpush1.msra.mxu0 0.0
    %102 = vmatprep.subr.mxu0 0.0
    %103 = vmatpush1.msra.mxu0 0.0
    %104 = vmatprep.subr.mxu0 0.0
    %105 = vmatpush1.msra.mxu0 0.0
    %106 = vmatprep.subr.mxu0 0.0
    %107 = vmatpush1.msra.mxu0 0.0
    %108 = vmatprep.subr.mxu0 0.0
    %109 = vmatpush1.msra.mxu0 0.0
    %110 = vmatprep.subr.mxu0 0.0
    %111 = vmatpush1.msra.mxu0 0.0
    %112 = vmatprep.subr.mxu0 0.0
    %113 = vmatpush1.msra.mxu0 0.0
    %114 = vmatprep.subr.mxu0 0.0
    %115 = vmatpush1.msra.mxu0 0.0
    %116 = vmatprep.subr.mxu0 0.0
    %117 = vmatpush1.msra.mxu0 0.0
    %118 = vmatprep.subr.mxu0 0.0
    %119 = vmatpush1.msra.mxu0 0.0
    %120 = vmatprep.subr.mxu0 0.0
    %121 = vmatpush1.msra.mxu0 0.0
    %122 = vmatprep.subr.mxu0 0.0
    %123 = vmatpush1.msra.mxu0 0.0
    %124 = vmatprep.subr.mxu0 0.0
    %125 = vmatpush1.msra.mxu0 0.0
    %126 = vmatprep.subr.mxu0 0.0
    %127 = vmatpush1.msra.mxu0 0.0
    %128 = vmatprep.subr.mxu0 0.0
    %129 = vmatpush1.msra.mxu0 0.0
    %130 = vmatprep.subr.mxu0 0.0
    %131 = vmatpush1.msra.mxu0 0.0
    %132 = vmatprep.subr.mxu0 0.0
    %133 = vmatpush1.msra.mxu0 0.0
    %134 = vmatprep.subr.mxu0 0.0
    %135 = vmatpush1.msra.mxu0 0.0
    %136 = vmatprep.subr.mxu0 0.0
    %137 = vmatpush1.msra.mxu0 0.0
    %138 = vmatprep.subr.mxu0 0.0
    %139 = vmatpush1.msra.mxu0 0.0
    %140 = vmatprep.subr.mxu0 0.0
    %141 = vmatpush1.msra.mxu0 0.0
    %142 = vmatprep.subr.mxu0 0.0
    %143 = vmatpush1.msra.mxu0 0.0
    %144 = vmatprep.subr.mxu0 0.0
    %145 = vmatpush1.msra.mxu0 0.0
    %146 = vmatprep.subr.mxu0 0.0
    %147 = vmatpush1.msra.mxu0 0.0
    %148 = vmatprep.subr.mxu0 0.0
    %149 = vmatpush1.msra.mxu0 0.0
    %150 = vmatprep.mubr.f32.mxu0 0.0
    %151 = vmatmul.mubr.f32.gmra.mrb[0].mxu0 %v81
    %v152 = vpop.f32.mrb[0].mxu0
    %v153 = vadd.f32 0.0, %v152
    %v154 = vpop.f32.mrb[0].mxu0
    %155 = vmatprep.mubr.f32.mxu0 0.0
    %156 = vmatmul.mubr.f32.gmra.mrb[0].mxu0 %v84
    %v157 = vpop.f32.mrb[0].mxu0
    %v158 = vadd.f32 0.0, %v157
    %v159 = vpop.f32.mrb[0].mxu0
    %160 = vdwg.mxu0
    %v161 = vld [vmem:[#allocation8] sm:$0xff]
    %v162 = vld [vmem:[#allocation8 + $0x8] sm:$0xff]
    %v164 = vsel %vm79, %v153, 0
    %v167 = vsel %vm79, %v158, 0
    %169 = vmatprep.subr.mxu0 0.0
    %170 = vmatpush1.xpose.msra.mxu0 %v81
    %171 = vmatprep.subr.mxu0 0.0
    %172 = vmatpush1.xpose.msra.mxu0 %v84
    %173 = vmatprep.subr.mxu0 0.0
    %174 = vmatpush1.xpose.msra.mxu0 0.0
    %175 = vmatprep.subr.mxu0 0.0
    %176 = vmatpush1.xpose.msra.mxu0 0.0
    %177 = vmatprep.subr.mxu0 0.0
    %178 = vmatpush1.xpose.msra.mxu0 0.0
    %179 = vmatprep.subr.mxu0 0.0
    %180 = vmatpush1.xpose.msra.mxu0 0.0
    %181 = vmatprep.subr.mxu0 0.0
    %182 = vmatpush1.xpose.msra.mxu0 0.0
    %183 = vmatprep.subr.mxu0 0.0
    %184 = vmatpush1.xpose.msra.mxu0 0.0
    %185 = vmatprep.subr.mxu0 0.0
    %186 = vmatpush1.xpose.msra.mxu0 0.0
    %187 = vmatprep.subr.mxu0 0.0
    %188 = vmatpush1.xpose.msra.mxu0 0.0
    %189 = vmatprep.subr.mxu0 0.0
    %190 = vmatpush1.xpose.msra.mxu0 0.0
    %191 = vmatprep.subr.mxu0 0.0
    %192 = vmatpush1.xpose.msra.mxu0 0.0
    %193 = vmatprep.subr.mxu0 0.0
    %194 = vmatpush1.xpose.msra.mxu0 0.0
    %195 = vmatprep.subr.mxu0 0.0
    %196 = vmatpush1.xpose.msra.mxu0 0.0
    %197 = vmatprep.subr.mxu0 0.0
    %198 = vmatpush1.xpose.msra.mxu0 0.0
    %199 = vmatprep.subr.mxu0 0.0
    %200 = vmatpush1.xpose.msra.mxu0 0.0
    %201 = vmatprep.subr.mxu0 0.0
    %202 = vmatpush1.xpose.msra.mxu0 0.0
    %203 = vmatprep.subr.mxu0 0.0
    %204 = vmatpush1.xpose.msra.mxu0 0.0
    %205 = vmatprep.subr.mxu0 0.0
    %206 = vmatpush1.xpose.msra.mxu0 0.0
    %207 = vmatprep.subr.mxu0 0.0
    %208 = vmatpush1.xpose.msra.mxu0 0.0
    %209 = vmatprep.subr.mxu0 0.0
    %210 = vmatpush1.xpose.msra.mxu0 0.0
    %211 = vmatprep.subr.mxu0 0.0
    %212 = vmatpush1.xpose.msra.mxu0 0.0
    %213 = vmatprep.subr.mxu0 0.0
    %214 = vmatpush1.xpose.msra.mxu0 0.0
    %215 = vmatprep.subr.mxu0 0.0
    %216 = vmatpush1.xpose.msra.mxu0 0.0
    %217 = vmatprep.subr.mxu0 0.0
    %218 = vmatpush1.xpose.msra.mxu0 0.0
    %219 = vmatprep.subr.mxu0 0.0
    %220 = vmatpush1.xpose.msra.mxu0 0.0
    %221 = vmatprep.subr.mxu0 0.0
    %222 = vmatpush1.xpose.msra.mxu0 0.0
    %223 = vmatprep.subr.mxu0 0.0
    %224 = vmatpush1.xpose.msra.mxu0 0.0
    %225 = vmatprep.subr.mxu0 0.0
    %226 = vmatpush1.xpose.msra.mxu0 0.0
    %227 = vmatprep.subr.mxu0 0.0
    %228 = vmatpush1.xpose.msra.mxu0 0.0
    %229 = vmatprep.subr.mxu0 0.0
    %230 = vmatpush1.xpose.msra.mxu0 0.0
    %231 = vmatprep.subr.mxu0 0.0
    %232 = vmatpush1.xpose.msra.mxu0 0.0
    %233 = vmatprep.mubr.f32.mxu0 0.0
    %234 = vmatmul.mubr.f32.gmra.mrb[0].mxu0 %v164
    %v235 = vpop.f32.mrb[0].mxu0
    %v236 = vadd.f32 %v161, %v235
    %v237 = vpop.f32.mrb[0].mxu0
    %238 = vmatprep.mubr.f32.mxu0 0.0
    %239 = vmatmul.mubr.f32.gmra.mrb[0].mxu0 %v167
    %v240 = vpop.f32.mrb[0].mxu0
    %v241 = vadd.f32 %v162, %v240
    %v242 = vpop.f32.mrb[0].mxu0
    %243 = vdwg.mxu0
    %vm244 = vcmask 130048
    %v245 = vsel %vm244, %v236, -inf
    %246 = vmax.xlane.f32.xlu0 %v245
    %v247 = vpop.xlane.xlu0 %246
    %v248 = vsel %vm244, %v241, -inf
    %249 = vmax.xlane.f32.xlu0 %v248
    %v250 = vpop.xlane.xlu0 %249
    %v251 = vsub.f32 %v236, %v247
    %v252 = vsub.f32 %v241, %v250
    %v253 = vmul.f32 %v251, 1.442695
    %v254 = vpow.pop %v253
    %v255 = vmul.f32 %v252, 1.442695
    %v256 = vpow.pop %v255
    %v257 = vsel %vm244, %v254, 0.0
    %258 = vadd.xlane.f32.xlu0 %v257
    %v259 = vpop.xlane.xlu0 %258
    %v260 = vsel %vm244, %v256, 0.0
    %261 = vadd.xlane.f32.xlu0 %v260
    %v262 = vpop.xlane.xlu0 %261
    %v263 = vrcp.pop %v259
    %v264 = vrcp.pop %v262
    %v265 = vmul.f32 %v254, %v263
    %v266 = vmul.f32 %v256, %v264
    %v267 = vld [vmem:[#allocation7] sm:$0xff]
    %v268 = vld [vmem:[#allocation7 + $0x8] sm:$0xff]
    %v269 = vld [vmem:[#allocation7 + $0x10] sm:$0xff]
    %v270 = vld [vmem:[#allocation7 + $0x18] sm:$0xff]
    %271 = vmatprep.subr.mxu0 0.0
    %272 = vmatpush1.msra.mxu0 %v267
    %273 = vmatprep.subr.mxu0 0.0
    %274 = vmatpush1.msra.mxu0 %v268
    %275 = vmatprep.subr.mxu0 0.0
    %276 = vmatpush1.msra.mxu0 %v269
    %277 = vmatprep.subr.mxu0 0.0
    %278 = vmatpush1.msra.mxu0 %v270
    %279 = vmatprep.subr.mxu0 0.0
    %280 = vmatpush1.msra.mxu0 0.0
    %281 = vmatprep.subr.mxu0 0.0
    %282 = vmatpush1.msra.mxu0 0.0
    %283 = vmatprep.subr.mxu0 0.0
    %284 = vmatpush1.msra.mxu0 0.0
    %285 = vmatprep.subr.mxu0 0.0
    %286 = vmatpush1.msra.mxu0 0.0
    %287 = vmatprep.subr.mxu0 0.0
    %288 = vmatpush1.msra.mxu0 0.0
    %289 = vmatprep.subr.mxu0 0.0
    %290 = vmatpush1.msra.mxu0 0.0
    %291 = vmatprep.subr.mxu0 0.0
    %292 = vmatpush1.msra.mxu0 0.0
    %293 = vmatprep.subr.mxu0 0.0
    %294 = vmatpush1.msra.mxu0 0.0
    %295 = vmatprep.subr.mxu0 0.0
    %296 = vmatpush1.msra.mxu0 0.0
    %297 = vmatprep.subr.mxu0 0.0
    %298 = vmatpush1.msra.mxu0 0.0
    %299 = vmatprep.subr.mxu0 0.0
    %300 = vmatpush1.msra.mxu0 0.0
    %301 = vmatprep.subr.mxu0 0.0
    %302 = vmatpush1.msra.mxu0 0.0
    %303 = vmatprep.subr.mxu0 0.0
    %304 = vmatpush1.msra.mxu0 0.0
    %305 = vmatprep.subr.mxu0 0.0
    %306 = vmatpush1.msra.mxu0 0.0
    %307 = vmatprep.subr.mxu0 0.0
    %308 = vmatpush1.msra.mxu0 0.0
    %309 = vmatprep.subr.mxu0 0.0
    %310 = vmatpush1.msra.mxu0 0.0
    %311 = vmatprep.subr.mxu0 0.0
    %312 = vmatpush1.msra.mxu0 0.0
    %313 = vmatprep.subr.mxu0 0.0
    %314 = vmatpush1.msra.mxu0 0.0
    %315 = vmatprep.subr.mxu0 0.0
    %316 = vmatpush1.msra.mxu0 0.0
    %317 = vmatprep.subr.mxu0 0.0
    %318 = vmatpush1.msra.mxu0 0.0
    %319 = vmatprep.subr.mxu0 0.0
    %320 = vmatpush1.msra.mxu0 0.0
    %321 = vmatprep.subr.mxu0 0.0
    %322 = vmatpush1.msra.mxu0 0.0
    %323 = vmatprep.subr.mxu0 0.0
    %324 = vmatpush1.msra.mxu0 0.0
    %325 = vmatprep.subr.mxu0 0.0
    %326 = vmatpush1.msra.mxu0 0.0
    %327 = vmatprep.subr.mxu0 0.0
    %328 = vmatpush1.msra.mxu0 0.0
    %329 = vmatprep.subr.mxu0 0.0
    %330 = vmatpush1.msra.mxu0 0.0
    %331 = vmatprep.subr.mxu0 0.0
    %332 = vmatpush1.msra.mxu0 0.0
    %333 = vmatprep.subr.mxu0 0.0
    %334 = vmatpush1.msra.mxu0 0.0
    %335 = vmatprep.mubr.f32.mxu0 0.0
    %336 = vmatmul.mubr.f32.gmra.mrb[0].mxu0 %v81
    %v337 = vpop.f32.mrb[0].mxu0
    %v338 = vadd.f32 0.0, %v337
    %v339 = vpop.f32.mrb[0].mxu0
    %340 = vmatprep.mubr.f32.mxu0 0.0
    %341 = vmatmul.mubr.f32.gmra.mrb[0].mxu0 %v84
    %v342 = vpop.f32.mrb[0].mxu0
    %v343 = vadd.f32 0.0, %v342
    %v344 = vpop.f32.mrb[0].mxu0
    %345 = vdwg.mxu0
    %v347 = vsel %vm244, %v265, 0
    %v350 = vsel %vm244, %v266, 0
    %352 = vmatprep.subr.mxu0 0.0
    %353 = vmatpush1.msra.mxu0 %v338
    %354 = vmatprep.subr.mxu0 0.0
    %355 = vmatpush1.msra.mxu0 %v343
    %356 = vmatprep.subr.mxu0 0.0
    %357 = vmatpush1.msra.mxu0 0.0
    %358 = vmatprep.subr.mxu0 0.0
    %359 = vmatpush1.msra.mxu0 0.0
    %360 = vmatprep.subr.mxu0 0.0
    %361 = vmatpush1.msra.mxu0 0.0
    %362 = vmatprep.subr.mxu0 0.0
    %363 = vmatpush1.msra.mxu0 0.0
    %364 = vmatprep.subr.mxu0 0.0
    %365 = vmatpush1.msra.mxu0 0.0
    %366 = vmatprep.subr.mxu0 0.0
    %367 = vmatpush1.msra.mxu0 0.0
    %368 = vmatprep.subr.mxu0 0.0
    %369 = vmatpush1.msra.mxu0 0.0
    %370 = vmatprep.subr.mxu0 0.0
    %371 = vmatpush1.msra.mxu0 0.0
    %372 = vmatprep.subr.mxu0 0.0
    %373 = vmatpush1.msra.mxu0 0.0
    %374 = vmatprep.subr.mxu0 0.0
    %375 = vmatpush1.msra.mxu0 0.0
    %376 = vmatprep.subr.mxu0 0.0
    %377 = vmatpush1.msra.mxu0 0.0
    %378 = vmatprep.subr.mxu0 0.0
    %379 = vmatpush1.msra.mxu0 0.0
    %380 = vmatprep.subr.mxu0 0.0
    %381 = vmatpush1.msra.mxu0 0.0
    %382 = vmatprep.subr.mxu0 0.0
    %383 = vmatpush1.msra.mxu0 0.0
    %384 = vmatprep.subr.mxu0 0.0
    %385 = vmatpush1.msra.mxu0 0.0
    %386 = vmatprep.subr.mxu0 0.0
    %387 = vmatpush1.msra.mxu0 0.0
    %388 = vmatprep.subr.mxu0 0.0
    %389 = vmatpush1.msra.mxu0 0.0
    %390 = vmatprep.subr.mxu0 0.0
    %391 = vmatpush1.msra.mxu0 0.0
    %392 = vmatprep.subr.mxu0 0.0
    %393 = vmatpush1.msra.mxu0 0.0
    %394 = vmatprep.subr.mxu0 0.0
    %395 = vmatpush1.msra.mxu0 0.0
    %396 = vmatprep.subr.mxu0 0.0
    %397 = vmatpush1.msra.mxu0 0.0
    %398 = vmatprep.subr.mxu0 0.0
    %399 = vmatpush1.msra.mxu0 0.0
    %400 = vmatprep.subr.mxu0 0.0
    %401 = vmatpush1.msra.mxu0 0.0
    %402 = vmatprep.subr.mxu0 0.0
    %403 = vmatpush1.msra.mxu0 0.0
    %404 = vmatprep.subr.mxu0 0.0
    %405 = vmatpush1.msra.mxu0 0.0
    %406 = vmatprep.subr.mxu0 0.0
    %407 = vmatpush1.msra.mxu0 0.0
    %408 = vmatprep.subr.mxu0 0.0
    %409 = vmatpush1.msra.mxu0 0.0
    %410 = vmatprep.subr.mxu0 0.0
    %411 = vmatpush1.msra.mxu0 0.0
    %412 = vmatprep.subr.mxu0 0.0
    %413 = vmatpush1.msra.mxu0 0.0
    %414 = vmatprep.subr.mxu0 0.0
    %415 = vmatpush1.msra.mxu0 0.0
    %416 = vmatprep.mubr.f32.mxu0 0.0
    %417 = vmatmul.mubr.f32.gmra.mrb[0].mxu0 %v347
    %v418 = vpop.f32.mrb[0].mxu0
    %v419 = vadd.f32 0.0, %v418
    %v420 = vpop.f32.mrb[0].mxu0
    %421 = vmatprep.mubr.f32.mxu0 0.0
    %422 = vmatmul.mubr.f32.gmra.mrb[0].mxu0 %v350
    %v423 = vpop.f32.mrb[0].mxu0
    %v424 = vadd.f32 0.0, %v423
    %v425 = vpop.f32.mrb[0].mxu0
    %426 = vdwg.mxu0
    %427 = vst.msk [vmem:[#allocation10] sm:$0xff] %vm79, %v419
    %428 = vst.msk [vmem:[#allocation10 + $0x8] sm:$0xff] %vm79, %v424
    // Predicated region
    $region34: #{self_attn.1} parent=1 // pred_check
      _
    $region35: #{self_attn.1} parent=1 // pred_check_branch
      %430 = sbr.rel (0) target = $region37
    $region36: #{self_attn.1} parent=1 // pred_region
      %s432 = ssub.s32 256, 256
      %433 = vsyncadd [#allocation4], %s432
      %s434 = sshll.u32 [#allocation10], 4
      %s435 = int_to_ptr.vmem [resolvable:$true] %s434
      %440 = dma.vmem_to_hbm [thread:$0]  %s435, 256, %s4, [#allocation4], 128, 128, 8
    $region37: #{self_attn.1} parent=1 // pred_fallthru
      _
    // Predicated region
    $region38: #{self_attn.1} parent=1 // pred_check
      _
    $region39: #{self_attn.1} parent=1 // pred_check_branch
      %442 = sbr.rel (0) target = $region41
    $region40: #{self_attn.1} parent=1 // pred_region
      %443 = dma.done [#allocation4], 256
    $region41: #{self_attn.1} parent=1 // pred_fallthru
      _
    %444 = vsyncpa [#allocation3], 1
    %445 = vsyncpa [#allocation6], 1
    %446 = vsyncpa [#allocation9], 1
    %447 = vsyncpa [#allocation4], 1

</llo_original>
